<compile_context>
chip_gen: v6e
topology: v6e:2x2x1
jax: 0.10.0
libtpu: 0.0.40
codegen_flags: <defaults>
</compile_context>

<pallas_src>
import jax
import jax.numpy as jnp
from jax.experimental import pallas as pl
from jax.experimental.pallas import tpu as pltpu


def _round_up(x, m):
    return (x + m - 1) // m * m


def mlp_kernel(x_ref, w1_ref, b1_ref, w2_ref, b2_ref, w3_ref, b3_ref, o_ref):
    # Cast the f32 batch tile to bf16 in-kernel (cheap VPU packs) so x is read
    # from HBM exactly once, with no wrapper-side cast pass.
    x_bf = x_ref[...].astype(jnp.bfloat16)

    # fc1 + ReLU: bf16 operands, f32 MXU accumulation, f32 epilogue.
    h1 = jnp.dot(x_bf, w1_ref[...], preferred_element_type=jnp.float32)
    h1 = jnp.maximum(h1 + b1_ref[...], 0.0)
    # TODO(synk): training-mode dropout (stochastic mask scaled by 1/(1-p)) is
    # not emitted; this is the eval-mode identity.

    # fc2 + ReLU (re-quantize the activation to bf16 for MXU throughput).
    h2 = jnp.dot(h1.astype(jnp.bfloat16), w2_ref[...],
                 preferred_element_type=jnp.float32)
    h2 = jnp.maximum(h2 + b2_ref[...], 0.0)

    # fc3 has N=1: a 1-column MXU matmul wastes 127/255 result columns, so do
    # it on the (otherwise idle) VPU + XLU: elementwise multiply + lane reduce.
    logits = jnp.sum(h2 * w3_ref[...], axis=-1, keepdims=True) + b3_ref[0, 0]

    # Minimal (TB, 1) store: 4 B/row of output HBM traffic.
    o_ref[...] = 1.0 / (1.0 + jnp.exp(-logits))


def prepare_params(params):
    """One-time preprocessing of the nn.Linear parameters for the kernel.

    Hoisted out of the forward so repeated calls do not pay the bf16 casts /
    reshapes (six small XLA ops + HBM round trips) per launch.
    """
    w1, b1, w2, b2, w3, b3 = params
    return (
        w1.astype(jnp.bfloat16),                 # (D, 512)   MXU operand
        b1.reshape(1, -1).astype(jnp.float32),   # (1, 512)   f32 epilogue
        w2.astype(jnp.bfloat16),                 # (512, 256) MXU operand
        b2.reshape(1, -1).astype(jnp.float32),   # (1, 256)
        w3.reshape(1, -1).astype(jnp.float32),   # (256,1) column -> (1,256) row
        b3.reshape(1, 1).astype(jnp.float32),    # (1, 1)     SMEM scalar
    )


def _choose_batch_tile(B, block_b):
    """Batch tile size.  Large batches get >= 2 balanced tiles (v7x megacore)."""
    block_b = max(8, block_b - block_b % 8)
    if B > block_b:
        # Balanced split capped at block_b; multiple of 8 keeps ragged last
        # blocks (8,128)-legal.
        return min(block_b, _round_up(pl.cdiv(B, 2), 8))
    if B >= 512:
        # Enough work to split across the two v7x TensorCores without the
        # per-step overhead dominating; harmless on single-TC v5e/v6e.
        return _round_up(pl.cdiv(B, 2), 8)
    # Single tile: block dims == full array dims, so no (8,128) constraint and
    # no padded rows at all.
    return B


def anomaly_classifier_forward(x, prepared_params, *, block_b=1024):
    """x: [B, input_dim] float32.  Returns [B, 1] float32 probabilities."""
    w1_b, b1_r, w2_b, b2_r, w3_row, b3_s = prepared_params
    B, D = x.shape
    H1 = w1_b.shape[1]
    H2 = w2_b.shape[1]

    TB = _choose_batch_tile(B, block_b)
    grid = (pl.cdiv(B, TB),)
    # VMEM working set at TB=1024: ~0.3 MiB resident bf16 weights + double-
    # buffered x tiles (2 x 128 KiB) and out tiles + ~4 MiB h1/h2 temporaries
    # -- well under the default scoped VMEM on every generation, so no
    # vmem_limit_bytes override is needed (including v7x's 64 MiB physical).

    return pl.pallas_call(
        mlp_kernel,
        out_shape=jax.ShapeDtypeStruct((B, 1), jnp.float32),
        grid=grid,
        in_specs=[
            pl.BlockSpec((TB, D), lambda i: (i, 0)),            # x batch tile (f32)
            pl.BlockSpec((D, H1), lambda i: (0, 0)),            # w1 (VMEM-resident)
            pl.BlockSpec((1, H1), lambda i: (0, 0)),            # b1 (resident)
            pl.BlockSpec((H1, H2), lambda i: (0, 0)),           # w2 (resident)
            pl.BlockSpec((1, H2), lambda i: (0, 0)),            # b2 (resident)
            pl.BlockSpec((1, H2), lambda i: (0, 0)),            # w3 row (resident)
            pl.BlockSpec(memory_space=pltpu.MemorySpace.SMEM),  # b3 scalar
        ],
        out_specs=pl.BlockSpec((TB, 1), lambda i: (i, 0)),
        compiler_params=pltpu.CompilerParams(
            dimension_semantics=("parallel",),  # shard batch tiles across v7x TCs
        ),
    )(x, w1_b, b1_r, w2_b, b2_r, w3_row, b3_s)


def init_params(key, input_dim):
    """Deterministic synthetic parameters matching nn.Linear shapes.

    PyTorch stores fc.weight as [out, in]; here we keep the transposed
    [in, out] layout so the kernel does x @ W directly.
    """
    k1, k2, k3, k4, k5, k6 = jax.random.split(key, 6)

    def uniform(k, shape, fan_in):
        bound = 1.0 / jnp.sqrt(fan_in)
        return jax.random.uniform(k, shape, jnp.float32, -bound, bound)

    w1 = uniform(k1, (input_dim, 512), input_dim)
    b1 = uniform(k2, (1, 512), input_dim)
    w2 = uniform(k3, (512, 256), 512)
    b2 = uniform(k4, (1, 256), 512)
    w3 = uniform(k5, (256, 1), 256)
    b3 = uniform(k6, (1, 1), 256)
    return (w1, b1, w2, b2, w3, b3)


def reference_forward_mixed(x, params):
    """Reference mirroring the kernel's bf16-operand / f32-accumulate arithmetic."""
    w1, b1, w2, b2, w3, b3 = params
    q = lambda a: a.astype(jnp.bfloat16).astype(jnp.float32)
    h1 = jnp.maximum(q(x) @ q(w1) + b1.reshape(1, -1), 0.0)
    h2 = jnp.maximum(q(h1) @ q(w2) + b2.reshape(1, -1), 0.0)
    return jax.nn.sigmoid(h2 @ w3 + b3.reshape(1, 1))


if __name__ == "__main__":
    key = jax.random.PRNGKey(0)
    kx, kp, kx2 = jax.random.split(key, 3)

    INPUT_DIM = 32
    params = init_params(kp, INPUT_DIM)
    prepared = prepare_params(params)

    # Small demo batch: single tile, block dims == full array dims.
    B = 8
    x = jax.random.normal(kx, (B, INPUT_DIM), jnp.float32)
    out = jax.block_until_ready(anomaly_classifier_forward(x, prepared))
    ref = reference_forward_mixed(x, params)
    assert out.shape == (B, 1)
    assert jnp.allclose(out, ref, atol=2e-3, rtol=0.0), \
        float(jnp.max(jnp.abs(out - ref)))

    # Larger batch exercising the multi-tile grid with a ragged last tile
    # (600 rows -> two 304-row tiles, no jnp.pad of x, masked tail writes).
    B2 = 600
    x2 = jax.random.normal(kx2, (B2, INPUT_DIM), jnp.float32)
    out2 = jax.block_until_ready(anomaly_classifier_forward(x2, prepared))
    ref2 = reference_forward_mixed(x2, params)
    assert out2.shape == (B2, 1)
    assert jnp.allclose(out2, ref2, atol=2e-3, rtol=0.0), \
        float(jnp.max(jnp.abs(out2 - ref2)))

    print("KERNEL_OK")
</pallas_src>

<mosaic_0001>
module attributes {stable_mosaic.version = 11 : i64} {
  func.func @mlp_kernel(%arg0: i32, %arg1: memref<8x32xf32, #tpu.memory_space<vmem>>, %arg2: memref<32x512xbf16, #tpu.memory_space<vmem>>, %arg3: memref<1x512xf32, #tpu.memory_space<vmem>>, %arg4: memref<512x256xbf16, #tpu.memory_space<vmem>>, %arg5: memref<1x256xf32, #tpu.memory_space<vmem>>, %arg6: memref<1x256xf32, #tpu.memory_space<vmem>>, %arg7: memref<1x1xf32, #tpu.memory_space<smem>>, %arg8: memref<8x1xf32, #tpu.memory_space<vmem>>) attributes {dimension_semantics = [#tpu.dimension_semantics<parallel>], iteration_bounds = array<i64: 1>, scalar_prefetch = 0 : i64, scratch_operands = 0 : i64, tpu.core_type = #tpu.core_type<tc>, window_params = [{transform_indices = @transform_0, window_bounds = array<i64: 8, 32>}, {pipeline_mode = #tpu.pipeline_mode<synchronous>, transform_indices = @transform_1, window_bounds = array<i64: 32, 512>}, {pipeline_mode = #tpu.pipeline_mode<synchronous>, transform_indices = @transform_2, window_bounds = array<i64: 1, 512>}, {pipeline_mode = #tpu.pipeline_mode<synchronous>, transform_indices = @transform_3, window_bounds = array<i64: 512, 256>}, {pipeline_mode = #tpu.pipeline_mode<synchronous>, transform_indices = @transform_4, window_bounds = array<i64: 1, 256>}, {pipeline_mode = #tpu.pipeline_mode<synchronous>, transform_indices = @transform_5, window_bounds = array<i64: 1, 256>}, {transform_indices = @transform_6, window_bounds = array<i64: 1, 1>}, {transform_indices = @transform_7, window_bounds = array<i64: 8, 1>}]} {
    %c0 = arith.constant 0 : index
    %c0_0 = arith.constant 0 : index
    %0 = vector.load %arg1[%c0, %c0_0] : memref<8x32xf32, #tpu.memory_space<vmem>>, vector<8x32xf32>
    %1 = arith.truncf %0 : vector<8x32xf32> to vector<8x32xbf16>
    %c0_1 = arith.constant 0 : index
    %c0_2 = arith.constant 0 : index
    %2 = vector.load %arg2[%c0_1, %c0_2] : memref<32x512xbf16, #tpu.memory_space<vmem>>, vector<32x512xbf16>
    %cst = arith.constant dense<0.000000e+00> : vector<8x512xf32>
    %3 = tpu.matmul %1, %2, %cst {dimension_numbers = #tpu.dot_dimension_numbers<[1], [0], [0], [1], [0, 0, 1, 1], [], []>} : vector<8x32xbf16>, vector<32x512xbf16>, vector<8x512xf32> -> vector<8x512xf32>
    %c0_3 = arith.constant 0 : index
    %c0_4 = arith.constant 0 : index
    %4 = vector.load %arg3[%c0_3, %c0_4] : memref<1x512xf32, #tpu.memory_space<vmem>>, vector<1x512xf32>
    %5 = vector.broadcast %4 : vector<1x512xf32> to vector<8x512xf32>
    %6 = arith.addf %3, %5 : vector<8x512xf32>
    %cst_5 = arith.constant 0.000000e+00 : f32
    %7 = vector.broadcast %cst_5 : f32 to vector<8x512xf32>
    %8 = arith.maximumf %6, %7 : vector<8x512xf32>
    %9 = arith.truncf %8 : vector<8x512xf32> to vector<8x512xbf16>
    %c0_6 = arith.constant 0 : index
    %c0_7 = arith.constant 0 : index
    %10 = vector.load %arg4[%c0_6, %c0_7] : memref<512x256xbf16, #tpu.memory_space<vmem>>, vector<512x256xbf16>
    %cst_8 = arith.constant dense<0.000000e+00> : vector<8x256xf32>
    %11 = tpu.matmul %9, %10, %cst_8 {dimension_numbers = #tpu.dot_dimension_numbers<[1], [0], [0], [1], [0, 0, 1, 1], [], []>} : vector<8x512xbf16>, vector<512x256xbf16>, vector<8x256xf32> -> vector<8x256xf32>
    %c0_9 = arith.constant 0 : index
    %c0_10 = arith.constant 0 : index
    %12 = vector.load %arg5[%c0_9, %c0_10] : memref<1x256xf32, #tpu.memory_space<vmem>>, vector<1x256xf32>
    %13 = vector.broadcast %12 : vector<1x256xf32> to vector<8x256xf32>
    %14 = arith.addf %11, %13 : vector<8x256xf32>
    %cst_11 = arith.constant 0.000000e+00 : f32
    %15 = vector.broadcast %cst_11 : f32 to vector<8x256xf32>
    %16 = arith.maximumf %14, %15 : vector<8x256xf32>
    %c0_12 = arith.constant 0 : index
    %c0_13 = arith.constant 0 : index
    %17 = vector.load %arg6[%c0_12, %c0_13] : memref<1x256xf32, #tpu.memory_space<vmem>>, vector<1x256xf32>
    %18 = vector.broadcast %17 : vector<1x256xf32> to vector<8x256xf32>
    %19 = arith.mulf %16, %18 : vector<8x256xf32>
    %cst_14 = arith.constant dense<0.000000e+00> : vector<8xf32>
    %20 = vector.multi_reduction <add>, %19, %cst_14 [1] : vector<8x256xf32> to vector<8xf32>
    %21 = vector.shape_cast %20 : vector<8xf32> to vector<8x1xf32>
    %c0_15 = arith.constant 0 : index
    %c0_16 = arith.constant 0 : index
    %22 = memref.load %arg7[%c0_15, %c0_16] : memref<1x1xf32, #tpu.memory_space<smem>>
    %23 = vector.broadcast %22 : f32 to vector<8x1xf32>
    %24 = arith.addf %21, %23 : vector<8x1xf32>
    %cst_17 = arith.constant 0.000000e+00 : f32
    %25 = vector.broadcast %cst_17 : f32 to vector<8x1xf32>
    %26 = arith.subf %25, %24 : vector<8x1xf32>
    %27 = math.exp %26 : vector<8x1xf32>
    %cst_18 = arith.constant 1.000000e+00 : f32
    %28 = vector.broadcast %cst_18 : f32 to vector<8x1xf32>
    %29 = arith.addf %28, %27 : vector<8x1xf32>
    %cst_19 = arith.constant 1.000000e+00 : f32
    %30 = vector.broadcast %cst_19 : f32 to vector<8x1xf32>
    %31 = arith.divf %30, %29 : vector<8x1xf32>
    %c0_20 = arith.constant 0 : index
    %c0_21 = arith.constant 0 : index
    %32 = vector.load %arg8[%c0_20, %c0_21] : memref<8x1xf32, #tpu.memory_space<vmem>>, vector<8x1xf32>
    tpu.vector_store %arg8[%c0_20, %c0_21], %31 {strides = array<i32>} : memref<8x1xf32, #tpu.memory_space<vmem>>, vector<8x1xf32>,
    return
  }
  func.func @transform_0(%arg0: i32) -> (i32, i32) {
    %c0_i32 = arith.constant 0 : i32
    %c0_i32_0 = arith.constant 0 : i32
    return %arg0, %c0_i32 : i32, i32
  }
  func.func @transform_1(%arg0: i32) -> (i32, i32) {
    %c0_i32 = arith.constant 0 : i32
    %c0_i32_0 = arith.constant 0 : i32
    %c0_i32_1 = arith.constant 0 : i32
    return %c0_i32, %c0_i32_0 : i32, i32
  }
  func.func @transform_2(%arg0: i32) -> (i32, i32) {
    %c0_i32 = arith.constant 0 : i32
    %c0_i32_0 = arith.constant 0 : i32
    %c0_i32_1 = arith.constant 0 : i32
    return %c0_i32, %c0_i32_0 : i32, i32
  }
  func.func @transform_3(%arg0: i32) -> (i32, i32) {
    %c0_i32 = arith.constant 0 : i32
    %c0_i32_0 = arith.constant 0 : i32
    %c0_i32_1 = arith.constant 0 : i32
    return %c0_i32, %c0_i32_0 : i32, i32
  }
  func.func @transform_4(%arg0: i32) -> (i32, i32) {
    %c0_i32 = arith.constant 0 : i32
    %c0_i32_0 = arith.constant 0 : i32
    %c0_i32_1 = arith.constant 0 : i32
    return %c0_i32, %c0_i32_0 : i32, i32
  }
  func.func @transform_5(%arg0: i32) -> (i32, i32) {
    %c0_i32 = arith.constant 0 : i32
    %c0_i32_0 = arith.constant 0 : i32
    %c0_i32_1 = arith.constant 0 : i32
    return %c0_i32, %c0_i32_0 : i32, i32
  }
  func.func @transform_6(%arg0: i32) -> (i32, i32) {
    %c0_i32 = arith.constant 0 : i32
    %c0_i32_0 = arith.constant 0 : i32
    %c0_i32_1 = arith.constant 0 : i32
    return %c0_i32, %c0_i32_0 : i32, i32
  }
  func.func @transform_7(%arg0: i32) -> (i32, i32) {
    %c0_i32 = arith.constant 0 : i32
    %c0_i32_0 = arith.constant 0 : i32
    return %arg0, %c0_i32 : i32, i32
  }
}

</mosaic_0001>

<llo_original>
// kernel: tpu_custom_call.1
$region0: #{tpu_custom_call.1}
  #allocation0 [shape = 'u32[]', space=smem, size = 0x4, offset = 0x4, fixed_abs, tag = 'smem constant byte address 0x4 - core index']
  #allocation1 [shape = 'u32[144,128]{1,0:T(1,128)}', space=vmem, size = 0x12000, scoped, tag = 'internal scratch']
  #allocation2 [shape = 'f32[1,1]{1,0:T(1,128)S(6)}', space=smem, size = 0x200, scoped, tag = 'scoped memory for tpu_custom_call.1']
  %s0 = inlined_call_operand.hbm [shape: f32[8,32], index: 0, kind: input, shape index: {}]
  %s1 = inlined_call_operand.hbm [shape: bf16[32,512], index: 1, kind: input, shape index: {}]
  %s2 = inlined_call_operand.vmem [shape: f32[1,512], index: 2, kind: input, shape index: {}]
  %s3 = inlined_call_operand.hbm [shape: bf16[512,256], index: 3, kind: input, shape index: {}]
  %s4 = inlined_call_operand.vmem [shape: f32[1,256], index: 4, kind: input, shape index: {}]
  %s5 = inlined_call_operand.vmem [shape: f32[1,256], index: 5, kind: input, shape index: {}]
  %s6 = inlined_call_operand.<no memory space> [shape: f32[1,1], index: 6, kind: input, shape index: {}]
  %s7 = inlined_call_operand.vmem [shape: f32[8,1], index: 7, kind: output, shape index: {}]
  %s8 = sld [smem:[#allocation0]]
  $region50: #{tpu_custom_call.1} parent=0
    _
  %s10 = ssub.s32 1, %s8
  %s11 = scalar_select 0, %s10, %s8
  %12 = sst [smem:[#allocation2]] %s6
  $region1: #{tpu_custom_call.1} parent=0
    #allocation3 [shape = 'u8[4096]{0}', space=vmem, size = 0x1000, scoped, tag = 'input window, operand 0, single buffered']
    #allocation4 [shape = 's32[1]{0}', space=sflag, size = 0x4, scoped, tag = 'scoped memory for tpu_custom_call.1']
    #allocation5 [shape = 'u8[32768]{0}', space=vmem, size = 0x8000, scoped, tag = 'input window, operand 1, single buffered']
    #allocation6 [shape = 's32[1]{0}', space=sflag, size = 0x4, scoped, tag = 'scoped memory for tpu_custom_call.1']
    #allocation7 [shape = 'u8[262144]{0}', space=vmem, size = 0x40000, scoped, tag = 'input window, operand 3, single buffered']
    %13 = vsyncpa [#allocation4], 0
    %14 = vsyncpa [#allocation6], 0
    // Predicated region
    $region2: #{tpu_custom_call.1} parent=1 // pred_check
      _
    $region3: #{tpu_custom_call.1} parent=1 // pred_check_branch
      %16 = sbr.rel (0) target = $region5
    $region4: #{tpu_custom_call.1} parent=1 // pred_region
      %s18 = ssub.s32 128, 128
      %19 = vsyncadd [#allocation4], %s18
      %s21 = sshll.u32 [#allocation3], 4
      %s22 = int_to_ptr.vmem [resolvable:$true] %s21
      %24 = dma.hbm_to_vmem [thread:$0]  %s0, 128, %s22, [#allocation4]
    $region5: #{tpu_custom_call.1} parent=1 // pred_fallthru
      _
    // Predicated region
    $region6: #{tpu_custom_call.1} parent=1 // pred_check
      _
    $region7: #{tpu_custom_call.1} parent=1 // pred_check_branch
      %26 = sbr.rel (0) target = $region9
    $region8: #{tpu_custom_call.1} parent=1 // pred_region
      %s28 = ssub.s32 1024, 1024
      %29 = vsyncadd [#allocation6], %s28
      %s30 = sshll.u32 [#allocation5], 4
      %s31 = int_to_ptr.vmem [resolvable:$true] %s30
      %36 = dma.hbm_to_vmem [thread:$0]  %s1, 1024, %s31, [#allocation6], 256, 256, 16
    $region9: #{tpu_custom_call.1} parent=1 // pred_fallthru
      _
    // Predicated region
    $region10: #{tpu_custom_call.1} parent=1 // pred_check
      _
    $region11: #{tpu_custom_call.1} parent=1 // pred_check_branch
      %38 = sbr.rel (0) target = $region13
    $region12: #{tpu_custom_call.1} parent=1 // pred_region
      _
    $region13: #{tpu_custom_call.1} parent=1 // pred_fallthru
      _
    // Predicated region
    $region14: #{tpu_custom_call.1} parent=1 // pred_check
      _
    $region15: #{tpu_custom_call.1} parent=1 // pred_check_branch
      %40 = sbr.rel (0) target = $region17
    $region16: #{tpu_custom_call.1} parent=1 // pred_region
      %s42 = ssub.s32 8192, 8192
      %43 = vsyncadd [#allocation6], %s42
      %s44 = sshll.u32 [#allocation7], 4
      %s45 = int_to_ptr.vmem [resolvable:$true] %s44
      %50 = dma.hbm_to_vmem [thread:$0]  %s3, 8192, %s45, [#allocation6], 128, 128, 8
    $region17: #{tpu_custom_call.1} parent=1 // pred_fallthru
      _
    // Predicated region
    $region18: #{tpu_custom_call.1} parent=1 // pred_check
      _
    $region19: #{tpu_custom_call.1} parent=1 // pred_check_branch
      %52 = sbr.rel (0) target = $region21
    $region20: #{tpu_custom_call.1} parent=1 // pred_region
      _
    $region21: #{tpu_custom_call.1} parent=1 // pred_fallthru
      _
    // Predicated region
    $region22: #{tpu_custom_call.1} parent=1 // pred_check
      _
    $region23: #{tpu_custom_call.1} parent=1 // pred_check_branch
      %54 = sbr.rel (0) target = $region25
    $region24: #{tpu_custom_call.1} parent=1 // pred_region
      _
    $region25: #{tpu_custom_call.1} parent=1 // pred_fallthru
      _
    // Predicated region
    $region26: #{tpu_custom_call.1} parent=1 // pred_check
      _
    $region27: #{tpu_custom_call.1} parent=1 // pred_check_branch
      %56 = sbr.rel (0) target = $region29
    $region28: #{tpu_custom_call.1} parent=1 // pred_region
      _
    $region29: #{tpu_custom_call.1} parent=1 // pred_fallthru
      _
    // Predicated region
    $region30: #{tpu_custom_call.1} parent=1 // pred_check
      _
    $region31: #{tpu_custom_call.1} parent=1 // pred_check_branch
      %58 = sbr.rel (0) target = $region33
    $region32: #{tpu_custom_call.1} parent=1 // pred_region
      %59 = dma.done [#allocation4], 128
    $region33: #{tpu_custom_call.1} parent=1 // pred_fallthru
      _
    // Predicated region
    $region34: #{tpu_custom_call.1} parent=1 // pred_check
      _
    $region35: #{tpu_custom_call.1} parent=1 // pred_check_branch
      %61 = sbr.rel (0) target = $region37
    $region36: #{tpu_custom_call.1} parent=1 // pred_region
      %62 = dma.done [#allocation6], 1024
    $region37: #{tpu_custom_call.1} parent=1 // pred_fallthru
      _
    // Predicated region
    $region38: #{tpu_custom_call.1} parent=1 // pred_check
      _
    $region39: #{tpu_custom_call.1} parent=1 // pred_check_branch
      %64 = sbr.rel (0) target = $region41
    $region40: #{tpu_custom_call.1} parent=1 // pred_region
      %65 = dma.done [#allocation6], 8192
    $region41: #{tpu_custom_call.1} parent=1 // pred_fallthru
      _
    %v67 = vld [vmem:[#allocation3] sm:$0xff]
    %v68 = vpack.c.bf16 %v67, %v67
    %v69 = vld [vmem:[#allocation5] sm:$0xff]
    %v70 = vld [vmem:[#allocation5 + $0x8] sm:$0xff]
    %v71 = vld [vmem:[#allocation5 + $0x10] sm:$0xff]
    %v72 = vld [vmem:[#allocation5 + $0x18] sm:$0xff]
    %v73 = vld [vmem:[#allocation5 + $0x20] sm:$0xff]
    %v74 = vld [vmem:[#allocation5 + $0x28] sm:$0xff]
    %v75 = vld [vmem:[#allocation5 + $0x30] sm:$0xff]
    %v76 = vld [vmem:[#allocation5 + $0x38] sm:$0xff]
    %v77 = vld [vmem:[%s2] sm:$0xf]
    %v79 = vlaneseq
    %v80 = vshrl.u32 %v79, 7
    %v81 = vsub.s32 0, %v80
    %v82 = vrot.slane %v77, %v81
    %v83 = vlaneseq
    %v84 = vshrl.u32 %v83, 7
    %v85 = vsub.s32 1, %v84
    %v86 = vrot.slane %v77, %v85
    %v87 = vlaneseq
    %v88 = vshrl.u32 %v87, 7
    %v89 = vsub.s32 2, %v88
    %v90 = vrot.slane %v77, %v89
    %v91 = vlaneseq
    %v92 = vshrl.u32 %v91, 7
    %v93 = vsub.s32 3, %v92
    %v94 = vrot.slane %v77, %v93
    %v107 = vunpack.c.l.b16 %v69
    %v108 = vunpack.c.h.b16 %v69
    %v109 = vunpack.c.l.b16 %v70
    %v110 = vunpack.c.h.b16 %v70
    %v111 = vunpack.c.l.b16 %v71
    %v112 = vunpack.c.h.b16 %v71
    %v113 = vunpack.c.l.b16 %v72
    %v114 = vunpack.c.h.b16 %v72
    %v115 = vunpack.c.l.b16 %v73
    %v116 = vunpack.c.h.b16 %v73
    %v117 = vunpack.c.l.b16 %v74
    %v118 = vunpack.c.h.b16 %v74
    %v119 = vunpack.c.l.b16 %v75
    %v120 = vunpack.c.h.b16 %v75
    %v121 = vunpack.c.l.b16 %v76
    %v122 = vunpack.c.h.b16 %v76
    %v123 = vpack.c.b16 %v111, %v107
    %v124 = vpack.c.b16 %v112, %v108
    %v125 = vpack.c.b16 %v113, %v109
    %v126 = vpack.c.b16 %v114, %v110
    %v127 = vpack.c.b16 %v119, %v115
    %v128 = vpack.c.b16 %v120, %v116
    %v129 = vpack.c.b16 %v121, %v117
    %v130 = vpack.c.b16 %v122, %v118
    %vm139 = vcmask 261120
    %v141 = vsel %vm139, %v68, 0
    %143 = vmatprep.subr.bf16.mxu0 0
    %144 = vmatpush1.bf16.msra.mxu0 0
    %145 = vmatprep.subr.bf16.mxu0 0
    %146 = vmatpush1.bf16.msra.mxu0 0
    %147 = vmatprep.subr.bf16.mxu0 0
    %148 = vmatpush1.bf16.msra.mxu0 0
    %149 = vmatprep.subr.bf16.mxu0 0
    %150 = vmatpush1.bf16.msra.mxu0 0
    %151 = vmatprep.subr.bf16.mxu0 0
    %152 = vmatpush1.bf16.msra.mxu0 0
    %153 = vmatprep.subr.bf16.mxu0 0
    %154 = vmatpush1.bf16.msra.mxu0 0
    %155 = vmatprep.subr.bf16.mxu0 %v128
    %156 = vmatpush1.bf16.msra.mxu0 %v127
    %157 = vmatprep.subr.bf16.mxu0 %v124
    %158 = vmatpush1.bf16.msra.mxu0 %v123
    %159 = vmatprep.subr.bf16.mxu0 0
    %160 = vmatpush2.bf16.msra.mxu0 0
    %161 = vmatprep.subr.bf16.mxu0 0
    %162 = vmatpush2.bf16.msra.mxu0 0
    %163 = vmatprep.subr.bf16.mxu0 0
    %164 = vmatpush2.bf16.msra.mxu0 0
    %165 = vmatprep.subr.bf16.mxu0 0
    %166 = vmatpush2.bf16.msra.mxu0 0
    %167 = vmatprep.subr.bf16.mxu0 0
    %168 = vmatpush2.bf16.msra.mxu0 0
    %169 = vmatprep.subr.bf16.mxu0 0
    %170 = vmatpush2.bf16.msra.mxu0 0
    %171 = vmatprep.subr.bf16.mxu0 0
    %172 = vmatpush2.bf16.msra.mxu0 0
    %173 = vmatprep.subr.bf16.mxu0 0
    %174 = vmatpush2.bf16.msra.mxu0 0
    %175 = vmatprep.mubr.bf16.mxu0 0
    %176 = vmatmul.mubr.bf16.gmra.mxu0 %v141
    %v177 = vpop.f32.mrf.mxu0
    %v178 = vadd.f32 %v82, %v177
    %v179 = vpop.f32.mrf.mxu0
    %v180 = vadd.f32 %v86, %v179
    %v181 = vpop.f32.mrf.mxu0
    %v182 = vpop.f32.mrf.mxu0
    %183 = vdwg.mxu0
    %184 = vmatprep.subr.bf16.mxu0 0
    %185 = vmatpush1.bf16.msra.mxu0 0
    %186 = vmatprep.subr.bf16.mxu0 0
    %187 = vmatpush1.bf16.msra.mxu0 0
    %188 = vmatprep.subr.bf16.mxu0 0
    %189 = vmatpush1.bf16.msra.mxu0 0
    %190 = vmatprep.subr.bf16.mxu0 0
    %191 = vmatpush1.bf16.msra.mxu0 0
    %192 = vmatprep.subr.bf16.mxu0 0
    %193 = vmatpush1.bf16.msra.mxu0 0
    %194 = vmatprep.subr.bf16.mxu0 0
    %195 = vmatpush1.bf16.msra.mxu0 0
    %196 = vmatprep.subr.bf16.mxu0 %v130
    %197 = vmatpush1.bf16.msra.mxu0 %v129
    %198 = vmatprep.subr.bf16.mxu0 %v126
    %199 = vmatpush1.bf16.msra.mxu0 %v125
    %200 = vmatprep.subr.bf16.mxu0 0
    %201 = vmatpush2.bf16.msra.mxu0 0
    %202 = vmatprep.subr.bf16.mxu0 0
    %203 = vmatpush2.bf16.msra.mxu0 0
    %204 = vmatprep.subr.bf16.mxu0 0
    %205 = vmatpush2.bf16.msra.mxu0 0
    %206 = vmatprep.subr.bf16.mxu0 0
    %207 = vmatpush2.bf16.msra.mxu0 0
    %208 = vmatprep.subr.bf16.mxu0 0
    %209 = vmatpush2.bf16.msra.mxu0 0
    %210 = vmatprep.subr.bf16.mxu0 0
    %211 = vmatpush2.bf16.msra.mxu0 0
    %212 = vmatprep.subr.bf16.mxu0 0
    %213 = vmatpush2.bf16.msra.mxu0 0
    %214 = vmatprep.subr.bf16.mxu0 0
    %215 = vmatpush2.bf16.msra.mxu0 0
    %216 = vmatprep.mubr.bf16.mxu0 0
    %217 = vmatmul.mubr.bf16.gmra.mxu0 %v141
    %v218 = vpop.f32.mrf.mxu0
    %v219 = vadd.f32 %v90, %v218
    %v220 = vpop.f32.mrf.mxu0
    %v221 = vadd.f32 %v94, %v220
    %v222 = vpop.f32.mrf.mxu0
    %v223 = vpop.f32.mrf.mxu0
    %224 = vdwg.mxu0
    %v225 = vmax.f32 %v178, 0.0
    %v226 = vmax.f32 %v180, 0.0
    %v227 = vmax.f32 %v219, 0.0
    %v228 = vmax.f32 %v221, 0.0
    %v229 = vpack.c.bf16 %v225, %v225
    %v230 = vpack.c.bf16 %v226, %v226
    %v231 = vpack.c.bf16 %v227, %v227
    %v232 = vpack.c.bf16 %v228, %v228
    %v233 = vld [vmem:[#allocation7] sm:$0xff]
    %v234 = vld [vmem:[#allocation7 + $0x8] sm:$0xff]
    %v235 = vld [vmem:[#allocation7 + $0x10] sm:$0xff]
    %v236 = vld [vmem:[#allocation7 + $0x18] sm:$0xff]
    %v237 = vld [vmem:[#allocation7 + $0x20] sm:$0xff]
    %v238 = vld [vmem:[#allocation7 + $0x28] sm:$0xff]
    %v239 = vld [vmem:[#allocation7 + $0x30] sm:$0xff]
    %v240 = vld [vmem:[#allocation7 + $0x38] sm:$0xff]
    %v241 = vld [vmem:[#allocation7 + $0x40] sm:$0xff]
    %v242 = vld [vmem:[#allocation7 + $0x48] sm:$0xff]
    %v243 = vld [vmem:[#allocation7 + $0x50] sm:$0xff]
    %v244 = vld [vmem:[#allocation7 + $0x58] sm:$0xff]
    %v245 = vld [vmem:[#allocation7 + $0x60] sm:$0xff]
    %v246 = vld [vmem:[#allocation7 + $0x68] sm:$0xff]
    %v247 = vld [vmem:[#allocation7 + $0x70] sm:$0xff]
    %v248 = vld [vmem:[#allocation7 + $0x78] sm:$0xff]
    %v249 = vld [vmem:[#allocation7 + $0x80] sm:$0xff]
    %v250 = vld [vmem:[#allocation7 + $0x88] sm:$0xff]
    %v251 = vld [vmem:[#allocation7 + $0x90] sm:$0xff]
    %v252 = vld [vmem:[#allocation7 + $0x98] sm:$0xff]
    %v253 = vld [vmem:[#allocation7 + $0xa0] sm:$0xff]
    %v254 = vld [vmem:[#allocation7 + $0xa8] sm:$0xff]
    %v255 = vld [vmem:[#allocation7 + $0xb0] sm:$0xff]
    %v256 = vld [vmem:[#allocation7 + $0xb8] sm:$0xff]
    %v257 = vld [vmem:[#allocation7 + $0xc0] sm:$0xff]
    %v258 = vld [vmem:[#allocation7 + $0xc8] sm:$0xff]
    %v259 = vld [vmem:[#allocation7 + $0xd0] sm:$0xff]
    %v260 = vld [vmem:[#allocation7 + $0xd8] sm:$0xff]
    %v261 = vld [vmem:[#allocation7 + $0xe0] sm:$0xff]
    %v262 = vld [vmem:[#allocation7 + $0xe8] sm:$0xff]
    %v263 = vld [vmem:[#allocation7 + $0xf0] sm:$0xff]
    %v264 = vld [vmem:[#allocation7 + $0xf8] sm:$0xff]
    %v265 = vld [vmem:[#allocation7 + $0x100] sm:$0xff]
    %v266 = vld [vmem:[#allocation7 + $0x108] sm:$0xff]
    %v267 = vld [vmem:[#allocation7 + $0x110] sm:$0xff]
    %v268 = vld [vmem:[#allocation7 + $0x118] sm:$0xff]
    %v269 = vld [vmem:[#allocation7 + $0x120] sm:$0xff]
    %v270 = vld [vmem:[#allocation7 + $0x128] sm:$0xff]
    %v271 = vld [vmem:[#allocation7 + $0x130] sm:$0xff]
    %v272 = vld [vmem:[#allocation7 + $0x138] sm:$0xff]
    %v273 = vld [vmem:[#allocation7 + $0x140] sm:$0xff]
    %v274 = vld [vmem:[#allocation7 + $0x148] sm:$0xff]
    %v275 = vld [vmem:[#allocation7 + $0x150] sm:$0xff]
    %v276 = vld [vmem:[#allocation7 + $0x158] sm:$0xff]
    %v277 = vld [vmem:[#allocation7 + $0x160] sm:$0xff]
    %v278 = vld [vmem:[#allocation7 + $0x168] sm:$0xff]
    %v279 = vld [vmem:[#allocation7 + $0x170] sm:$0xff]
    %v280 = vld [vmem:[#allocation7 + $0x178] sm:$0xff]
    %v281 = vld [vmem:[#allocation7 + $0x180] sm:$0xff]
    %v282 = vld [vmem:[#allocation7 + $0x188] sm:$0xff]
    %v283 = vld [vmem:[#allocation7 + $0x190] sm:$0xff]
    %v284 = vld [vmem:[#allocation7 + $0x198] sm:$0xff]
    %v285 = vld [vmem:[#allocation7 + $0x1a0] sm:$0xff]
    %v286 = vld [vmem:[#allocation7 + $0x1a8] sm:$0xff]
    %v287 = vld [vmem:[#allocation7 + $0x1b0] sm:$0xff]
    %v288 = vld [vmem:[#allocation7 + $0x1b8] sm:$0xff]
    %v289 = vld [vmem:[#allocation7 + $0x1c0] sm:$0xff]
    %v290 = vld [vmem:[#allocation7 + $0x1c8] sm:$0xff]
    %v291 = vld [vmem:[#allocation7 + $0x1d0] sm:$0xff]
    %v292 = vld [vmem:[#allocation7 + $0x1d8] sm:$0xff]
    %v293 = vld [vmem:[#allocation7 + $0x1e0] sm:$0xff]
    %v294 = vld [vmem:[#allocation7 + $0x1e8] sm:$0xff]
    %v295 = vld [vmem:[#allocation7 + $0x1f0] sm:$0xff]
    %v296 = vld [vmem:[#allocation7 + $0x1f8] sm:$0xff]
    %v297 = vld [vmem:[%s4] sm:$0x3]
    %v299 = vlaneseq
    %v300 = vshrl.u32 %v299, 7
    %v301 = vsub.s32 0, %v300
    %v302 = vrot.slane %v297, %v301
    %v303 = vlaneseq
    %v304 = vshrl.u32 %v303, 7
    %v305 = vsub.s32 1, %v304
    %v306 = vrot.slane %v297, %v305
    %v373 = vunpack.c.l.b16 %v233
    %v374 = vunpack.c.h.b16 %v233
    %v375 = vunpack.c.l.b16 %v234
    %v376 = vunpack.c.h.b16 %v234
    %v377 = vunpack.c.l.b16 %v235
    %v378 = vunpack.c.h.b16 %v235
    %v379 = vunpack.c.l.b16 %v236
    %v380 = vunpack.c.h.b16 %v236
    %v381 = vunpack.c.l.b16 %v237
    %v382 = vunpack.c.h.b16 %v237
    %v383 = vunpack.c.l.b16 %v238
    %v384 = vunpack.c.h.b16 %v238
    %v385 = vunpack.c.l.b16 %v239
    %v386 = vunpack.c.h.b16 %v239
    %v387 = vunpack.c.l.b16 %v240
    %v388 = vunpack.c.h.b16 %v240
    %v389 = vunpack.c.l.b16 %v241
    %v390 = vunpack.c.h.b16 %v241
    %v391 = vunpack.c.l.b16 %v242
    %v392 = vunpack.c.h.b16 %v242
    %v393 = vunpack.c.l.b16 %v243
    %v394 = vunpack.c.h.b16 %v243
    %v395 = vunpack.c.l.b16 %v244
    %v396 = vunpack.c.h.b16 %v244
    %v397 = vunpack.c.l.b16 %v245
    %v398 = vunpack.c.h.b16 %v245
    %v399 = vunpack.c.l.b16 %v246
    %v400 = vunpack.c.h.b16 %v246
    %v401 = vunpack.c.l.b16 %v247
    %v402 = vunpack.c.h.b16 %v247
    %v403 = vunpack.c.l.b16 %v248
    %v404 = vunpack.c.h.b16 %v248
    %v405 = vunpack.c.l.b16 %v249
    %v406 = vunpack.c.h.b16 %v249
    %v407 = vunpack.c.l.b16 %v250
    %v408 = vunpack.c.h.b16 %v250
    %v409 = vunpack.c.l.b16 %v251
    %v410 = vunpack.c.h.b16 %v251
    %v411 = vunpack.c.l.b16 %v252
    %v412 = vunpack.c.h.b16 %v252
    %v413 = vunpack.c.l.b16 %v253
    %v414 = vunpack.c.h.b16 %v253
    %v415 = vunpack.c.l.b16 %v254
    %v416 = vunpack.c.h.b16 %v254
    %v417 = vunpack.c.l.b16 %v255
    %v418 = vunpack.c.h.b16 %v255
    %v419 = vunpack.c.l.b16 %v256
    %v420 = vunpack.c.h.b16 %v256
    %v421 = vunpack.c.l.b16 %v257
    %v422 = vunpack.c.h.b16 %v257
    %v423 = vunpack.c.l.b16 %v258
    %v424 = vunpack.c.h.b16 %v258
    %v425 = vunpack.c.l.b16 %v259
    %v426 = vunpack.c.h.b16 %v259
    %v427 = vunpack.c.l.b16 %v260
    %v428 = vunpack.c.h.b16 %v260
    %v429 = vunpack.c.l.b16 %v261
    %v430 = vunpack.c.h.b16 %v261
    %v431 = vunpack.c.l.b16 %v262
    %v432 = vunpack.c.h.b16 %v262
    %v433 = vunpack.c.l.b16 %v263
    %v434 = vunpack.c.h.b16 %v263
    %v435 = vunpack.c.l.b16 %v264
    %v436 = vunpack.c.h.b16 %v264
    %v437 = vunpack.c.l.b16 %v265
    %v438 = vunpack.c.h.b16 %v265
    %v439 = vunpack.c.l.b16 %v266
    %v440 = vunpack.c.h.b16 %v266
    %v441 = vunpack.c.l.b16 %v267
    %v442 = vunpack.c.h.b16 %v267
    %v443 = vunpack.c.l.b16 %v268
    %v444 = vunpack.c.h.b16 %v268
    %v445 = vunpack.c.l.b16 %v269
    %v446 = vunpack.c.h.b16 %v269
    %v447 = vunpack.c.l.b16 %v270
    %v448 = vunpack.c.h.b16 %v270
    %v449 = vunpack.c.l.b16 %v271
    %v450 = vunpack.c.h.b16 %v271
    %v451 = vunpack.c.l.b16 %v272
    %v452 = vunpack.c.h.b16 %v272
    %v453 = vunpack.c.l.b16 %v273
    %v454 = vunpack.c.h.b16 %v273
    %v455 = vunpack.c.l.b16 %v274
    %v456 = vunpack.c.h.b16 %v274
    %v457 = vunpack.c.l.b16 %v275
    %v458 = vunpack.c.h.b16 %v275
    %v459 = vunpack.c.l.b16 %v276
    %v460 = vunpack.c.h.b16 %v276
    %v461 = vunpack.c.l.b16 %v277
    %v462 = vunpack.c.h.b16 %v277
    %v463 = vunpack.c.l.b16 %v278
    %v464 = vunpack.c.h.b16 %v278
    %v465 = vunpack.c.l.b16 %v279
    %v466 = vunpack.c.h.b16 %v279
    %v467 = vunpack.c.l.b16 %v280
    %v468 = vunpack.c.h.b16 %v280
    %v469 = vunpack.c.l.b16 %v281
    %v470 = vunpack.c.h.b16 %v281
    %v471 = vunpack.c.l.b16 %v282
    %v472 = vunpack.c.h.b16 %v282
    %v473 = vunpack.c.l.b16 %v283
    %v474 = vunpack.c.h.b16 %v283
    %v475 = vunpack.c.l.b16 %v284
    %v476 = vunpack.c.h.b16 %v284
    %v477 = vunpack.c.l.b16 %v285
    %v478 = vunpack.c.h.b16 %v285
    %v479 = vunpack.c.l.b16 %v286
    %v480 = vunpack.c.h.b16 %v286
    %v481 = vunpack.c.l.b16 %v287
    %v482 = vunpack.c.h.b16 %v287
    %v483 = vunpack.c.l.b16 %v288
    %v484 = vunpack.c.h.b16 %v288
    %v485 = vunpack.c.l.b16 %v289
    %v486 = vunpack.c.h.b16 %v289
    %v487 = vunpack.c.l.b16 %v290
    %v488 = vunpack.c.h.b16 %v290
    %v489 = vunpack.c.l.b16 %v291
    %v490 = vunpack.c.h.b16 %v291
    %v491 = vunpack.c.l.b16 %v292
    %v492 = vunpack.c.h.b16 %v292
    %v493 = vunpack.c.l.b16 %v293
    %v494 = vunpack.c.h.b16 %v293
    %v495 = vunpack.c.l.b16 %v294
    %v496 = vunpack.c.h.b16 %v294
    %v497 = vunpack.c.l.b16 %v295
    %v498 = vunpack.c.h.b16 %v295
    %v499 = vunpack.c.l.b16 %v296
    %v500 = vunpack.c.h.b16 %v296
    %v501 = vpack.c.b16 %v375, %v373
    %v502 = vpack.c.b16 %v376, %v374
    %v503 = vpack.c.b16 %v379, %v377
    %v504 = vpack.c.b16 %v380, %v378
    %v505 = vpack.c.b16 %v383, %v381
    %v506 = vpack.c.b16 %v384, %v382
    %v507 = vpack.c.b16 %v387, %v385
    %v508 = vpack.c.b16 %v388, %v386
    %v509 = vpack.c.b16 %v391, %v389
    %v510 = vpack.c.b16 %v392, %v390
    %v511 = vpack.c.b16 %v395, %v393
    %v512 = vpack.c.b16 %v396, %v394
    %v513 = vpack.c.b16 %v399, %v397
    %v514 = vpack.c.b16 %v400, %v398
    %v515 = vpack.c.b16 %v403, %v401
    %v516 = vpack.c.b16 %v404, %v402
    %v517 = vpack.c.b16 %v407, %v405
    %v518 = vpack.c.b16 %v408, %v406
    %v519 = vpack.c.b16 %v411, %v409
    %v520 = vpack.c.b16 %v412, %v410
    %v521 = vpack.c.b16 %v415, %v413
    %v522 = vpack.c.b16 %v416, %v414
    %v523 = vpack.c.b16 %v419, %v417
    %v524 = vpack.c.b16 %v420, %v418
    %v525 = vpack.c.b16 %v423, %v421
    %v526 = vpack.c.b16 %v424, %v422
    %v527 = vpack.c.b16 %v427, %v425
    %v528 = vpack.c.b16 %v428, %v426
    %v529 = vpack.c.b16 %v431, %v429
    %v530 = vpack.c.b16 %v432, %v430
    %v531 = vpack.c.b16 %v435, %v433
    %v532 = vpack.c.b16 %v436, %v434
    %v533 = vpack.c.b16 %v439, %v437
    %v534 = vpack.c.b16 %v440, %v438
    %v535 = vpack.c.b16 %v443, %v441
    %v536 = vpack.c.b16 %v444, %v442
    %v537 = vpack.c.b16 %v447, %v445
    %v538 = vpack.c.b16 %v448, %v446
    %v539 = vpack.c.b16 %v451, %v449
    %v540 = vpack.c.b16 %v452, %v450
    %v541 = vpack.c.b16 %v455, %v453
    %v542 = vpack.c.b16 %v456, %v454
    %v543 = vpack.c.b16 %v459, %v457
    %v544 = vpack.c.b16 %v460, %v458
    %v545 = vpack.c.b16 %v463, %v461
    %v546 = vpack.c.b16 %v464, %v462
    %v547 = vpack.c.b16 %v467, %v465
    %v548 = vpack.c.b16 %v468, %v466
    %v549 = vpack.c.b16 %v471, %v469
    %v550 = vpack.c.b16 %v472, %v470
    %v551 = vpack.c.b16 %v475, %v473
    %v552 = vpack.c.b16 %v476, %v474
    %v553 = vpack.c.b16 %v479, %v477
    %v554 = vpack.c.b16 %v480, %v478
    %v555 = vpack.c.b16 %v483, %v481
    %v556 = vpack.c.b16 %v484, %v482
    %v557 = vpack.c.b16 %v487, %v485
    %v558 = vpack.c.b16 %v488, %v486
    %v559 = vpack.c.b16 %v491, %v489
    %v560 = vpack.c.b16 %v492, %v490
    %v561 = vpack.c.b16 %v495, %v493
    %v562 = vpack.c.b16 %v496, %v494
    %v563 = vpack.c.b16 %v499, %v497
    %v564 = vpack.c.b16 %v500, %v498
    %629 = vmatprep.subr.bf16.mxu0 %v516
    %630 = vmatpush1.bf16.msra.mxu0 %v515
    %631 = vmatprep.subr.bf16.mxu0 %v514
    %632 = vmatpush1.bf16.msra.mxu0 %v513
    %633 = vmatprep.subr.bf16.mxu0 %v512
    %634 = vmatpush1.bf16.msra.mxu0 %v511
    %635 = vmatprep.subr.bf16.mxu0 %v510
    %636 = vmatpush1.bf16.msra.mxu0 %v509
    %637 = vmatprep.subr.bf16.mxu0 %v508
    %638 = vmatpush1.bf16.msra.mxu0 %v507
    %639 = vmatprep.subr.bf16.mxu0 %v506
    %640 = vmatpush1.bf16.msra.mxu0 %v505
    %641 = vmatprep.subr.bf16.mxu0 %v504
    %642 = vmatpush1.bf16.msra.mxu0 %v503
    %643 = vmatprep.subr.bf16.mxu0 %v502
    %644 = vmatpush1.bf16.msra.mxu0 %v501
    %645 = vmatprep.subr.bf16.mxu0 %v532
    %646 = vmatpush2.bf16.msra.mxu0 %v531
    %647 = vmatprep.subr.bf16.mxu0 %v530
    %648 = vmatpush2.bf16.msra.mxu0 %v529
    %649 = vmatprep.subr.bf16.mxu0 %v528
    %650 = vmatpush2.bf16.msra.mxu0 %v527
    %651 = vmatprep.subr.bf16.mxu0 %v526
    %652 = vmatpush2.bf16.msra.mxu0 %v525
    %653 = vmatprep.subr.bf16.mxu0 %v524
    %654 = vmatpush2.bf16.msra.mxu0 %v523
    %655 = vmatprep.subr.bf16.mxu0 %v522
    %656 = vmatpush2.bf16.msra.mxu0 %v521
    %657 = vmatprep.subr.bf16.mxu0 %v520
    %658 = vmatpush2.bf16.msra.mxu0 %v519
    %659 = vmatprep.subr.bf16.mxu0 %v518
    %660 = vmatpush2.bf16.msra.mxu0 %v517
    %661 = vmatprep.mubr.bf16.mxu0 %v230
    %662 = vmatmul.mubr.bf16.gmra.mxu0 %v229
    %v663 = vpop.f32.mrf.mxu0
    %v664 = vadd.f32 %v302, %v663
    %v665 = vpop.f32.mrf.mxu0
    %v666 = vadd.f32 %v306, %v665
    %v667 = vpop.f32.mrf.mxu0
    %v668 = vpop.f32.mrf.mxu0
    %669 = vdwg.mxu0
    %670 = vmatprep.subr.bf16.mxu0 %v548
    %671 = vmatpush1.bf16.msra.mxu0 %v547
    %672 = vmatprep.subr.bf16.mxu0 %v546
    %673 = vmatpush1.bf16.msra.mxu0 %v545
    %674 = vmatprep.subr.bf16.mxu0 %v544
    %675 = vmatpush1.bf16.msra.mxu0 %v543
    %676 = vmatprep.subr.bf16.mxu0 %v542
    %677 = vmatpush1.bf16.msra.mxu0 %v541
    %678 = vmatprep.subr.bf16.mxu0 %v540
    %679 = vmatpush1.bf16.msra.mxu0 %v539
    %680 = vmatprep.subr.bf16.mxu0 %v538
    %681 = vmatpush1.bf16.msra.mxu0 %v537
    %682 = vmatprep.subr.bf16.mxu0 %v536
    %683 = vmatpush1.bf16.msra.mxu0 %v535
    %684 = vmatprep.subr.bf16.mxu0 %v534
    %685 = vmatpush1.bf16.msra.mxu0 %v533
    %686 = vmatprep.subr.bf16.mxu0 %v564
    %687 = vmatpush2.bf16.msra.mxu0 %v563
    %688 = vmatprep.subr.bf16.mxu0 %v562
    %689 = vmatpush2.bf16.msra.mxu0 %v561
    %690 = vmatprep.subr.bf16.mxu0 %v560
    %691 = vmatpush2.bf16.msra.mxu0 %v559
    %692 = vmatprep.subr.bf16.mxu0 %v558
    %693 = vmatpush2.bf16.msra.mxu0 %v557
    %694 = vmatprep.subr.bf16.mxu0 %v556
    %695 = vmatpush2.bf16.msra.mxu0 %v555
    %696 = vmatprep.subr.bf16.mxu0 %v554
    %697 = vmatpush2.bf16.msra.mxu0 %v553
    %698 = vmatprep.subr.bf16.mxu0 %v552
    %699 = vmatpush2.bf16.msra.mxu0 %v551
    %700 = vmatprep.subr.bf16.mxu0 %v550
    %701 = vmatpush2.bf16.msra.mxu0 %v549
    %702 = vmatprep.mubr.bf16.mxu0 %v232
    %703 = vmatmul.mubr.bf16.gmra.mxu0 %v231
    %v704 = vpop.f32.mrf.mxu0
    %v705 = vadd.f32 %v664, %v704
    %v706 = vpop.f32.mrf.mxu0
    %v707 = vadd.f32 %v666, %v706
    %v708 = vpop.f32.mrf.mxu0
    %v709 = vpop.f32.mrf.mxu0
    %710 = vdwg.mxu0
    %v711 = vmax.f32 %v705, 0.0
    %v712 = vmax.f32 %v707, 0.0
    %v713 = vld [vmem:[%s5] sm:$0x3]
    %v715 = vlaneseq
    %v716 = vshrl.u32 %v715, 7
    %v717 = vsub.s32 0, %v716
    %v718 = vrot.slane %v713, %v717
    %v719 = vlaneseq
    %v720 = vshrl.u32 %v719, 7
    %v721 = vsub.s32 1, %v720
    %v722 = vrot.slane %v713, %v721
    %v725 = vmul.f32 %v711, %v718
    %v726 = vmul.f32 %v712, %v722
    %v727 = vadd.f32 %v725, %v726
    %728 = vadd.xlane.f32.xlu0 %v727
    %v729 = vpop.xlane.xlu0 %728
    %s730 = sld [smem:[#allocation2]]
    %v731 = vstv %s730
    %v732 = vadd.f32 %v729, %v731
    %v733 = vsub.f32 0.0, %v732
    %v734 = vmul.f32 %v733, 1.442695
    %v735 = vpow.pop %v734
    %v736 = vadd.f32 %v735, 1.0
    %v737 = vrcp.pop %v736
    %v738 = vmul.f32 1.0, %v737
    %vm739 = vcmask 7168
    %740 = vst.msk [vmem:[%s7] sm:$0xff] %vm739, %v738
    // Predicated region
    $region42: #{tpu_custom_call.1} parent=1 // pred_check
      _
    $region43: #{tpu_custom_call.1} parent=1 // pred_check_branch
      %742 = sbr.rel (0) target = $region45
    $region44: #{tpu_custom_call.1} parent=1 // pred_region
      _
    $region45: #{tpu_custom_call.1} parent=1 // pred_fallthru
      _
    // Predicated region
    $region46: #{tpu_custom_call.1} parent=1 // pred_check
      _
    $region47: #{tpu_custom_call.1} parent=1 // pred_check_branch
      %744 = sbr.rel (0) target = $region49
    $region48: #{tpu_custom_call.1} parent=1 // pred_region
      _
    $region49: #{tpu_custom_call.1} parent=1 // pred_fallthru
      _
    %745 = vsyncpa [#allocation4], 1
    %746 = vsyncpa [#allocation6], 1

</llo_original>
